<compile_context>
chip_gen: v6e
topology: v6e:2x2x1
jax: 0.10.0
libtpu: 0.0.40
codegen_flags: <defaults>
</compile_context>

<pallas_src>
import functools

import jax
import jax.numpy as jnp
from jax.experimental import pallas as pl
from jax.experimental.pallas import tpu as pltpu


def _round_up(x: int, m: int) -> int:
    return ((x + m - 1) // m) * m


def _patch_embed_kernel(a_ref, w_ref, o_ref):
    # a_ref: (tm, K) bf16 patch rows, w_ref: (K, d_model) bf16 (constant index
    # map -> fetched once, stays VMEM-resident across all M tiles),
    # o_ref: (tm, d_model) in the final output dtype.  Single full-K
    # contraction on the MXU with f32 accumulation, cast once in-kernel.
    o_ref[...] = jnp.dot(
        a_ref[...], w_ref[...], preferred_element_type=jnp.float32
    ).astype(o_ref.dtype)


@functools.partial(jax.jit, static_argnames=("patch_size", "d_model"))
def patch_embedding_forward(x, conv_weight, *, patch_size, d_model):
    """x: (B, 3, H, W) NCHW.  conv_weight: (d_model, 3, P, P).

    Returns (B, num_patches, d_model), matching
    Conv2d(3, d_model, P, stride=P, bias=False)(x).flatten(2).transpose(1, 2).

    Precision contract: operands are fed to the MXU in bf16 with f32
    accumulation (standard ViT practice); ~1e-2 relative vs full-f32 PyTorch.
    """
    B, C, H, W = x.shape
    P = patch_size
    Hp, Wp = H // P, W // P
    Np = Hp * Wp
    K = C * P * P
    M = B * Np
    out_dtype = x.dtype
    out_bytes = jnp.dtype(out_dtype).itemsize

    # Strided conv drops trailing pixels if H/W are not multiples of P.
    x = x[:, :, : Hp * P, : Wp * P]

    # --- glue (one fused relayout pass under this jit): NCHW -> (M, K) patch
    # rows with feature order (c, kh, kw) matching the Conv2d weight layout
    # (out, in, kh, kw); downcast to bf16 in the same pass.
    # TODO(synk): fold this patchify into the kernel (per-(B, Hp) strip
    # BlockSpec + in-VMEM rearrange) to remove the standalone relayout pass.
    patches = (
        x.reshape(B, C, Hp, P, Wp, P)
        .transpose(0, 2, 4, 1, 3, 5)
        .reshape(M, K)
        .astype(jnp.bfloat16)
    )
    w = conv_weight.reshape(d_model, K).T.astype(jnp.bfloat16)  # (K, d_model)

    # --- M-only tiling; weight fully VMEM-resident (no N grid axis, no K axis).
    vmem_budget = 24 * 1024 * 1024  # safe on v7x (64 MiB phys / 32 MiB scoped)
    tm = 1024
    # Give v7x's two TensorCores at least two M tiles on small inputs.
    tm = min(tm, max(8, _round_up(pl.cdiv(M, 2), 8)))

    def _working_set(tm_):
        # resident W + double-buffered A + double-buffered out
        return (K * d_model * 2) + 2 * (tm_ * K * 2) + 2 * (tm_ * d_model * out_bytes)

    while tm > 8 and _working_set(tm) > vmem_budget:
        tm //= 2
    tm = max(8, _round_up(tm, 8))

    grid = (pl.cdiv(M, tm),)
    cost = pl.CostEstimate(
        flops=2 * M * K * d_model,
        bytes_accessed=M * K * 2 + K * d_model * 2 + M * d_model * out_bytes,
        transcendentals=0,
    )

    out = pl.pallas_call(
        _patch_embed_kernel,
        out_shape=jax.ShapeDtypeStruct((M, d_model), out_dtype),
        grid_spec=pl.GridSpec(
            grid=grid,
            in_specs=[
                # A tile depends only on the M index; full-K block (K equals
                # the full array dim, so no 128-alignment padding needed).
                pl.BlockSpec((tm, K), lambda i: (i, 0)),
                # Constant index map -> weight DMA'd once, VMEM-resident.
                pl.BlockSpec((K, d_model), lambda i: (0, 0)),
            ],
            out_specs=pl.BlockSpec((tm, d_model), lambda i: (i, 0)),
        ),
        compiler_params=pltpu.CompilerParams(
            dimension_semantics=("parallel",),
            vmem_limit_bytes=32 * 1024 * 1024,
        ),
        cost_estimate=cost,
    )(patches, w)

    # Leading-dim split only -> no data movement.
    return out.reshape(B, Np, d_model)


if __name__ == "__main__":
    # Small shapes consistent with the module: C=3 (fixed by the conv),
    # B=2, spatial 16x16, patch_size=4 -> 16 patches/image, d_model=32.
    B, C, H, W = 2, 3, 16, 16
    patch_size = 4
    d_model = 32

    key = jax.random.PRNGKey(0)
    kx, kw = jax.random.split(key)
    x = jax.random.normal(kx, (B, C, H, W), dtype=jnp.float32)
    conv_weight = (
        jax.random.normal(kw, (d_model, C, patch_size, patch_size), dtype=jnp.float32)
        * 0.02
    )

    y = patch_embedding_forward(x, conv_weight, patch_size=patch_size, d_model=d_model)
    y = jax.block_until_ready(y)

    # References: same conv-as-matmul, (a) bf16 operands / f32 accumulation
    # (matches kernel precision contract), (b) full f32 (loose tolerance).
    Hp, Wp = H // patch_size, W // patch_size
    patches_ref = (
        x.reshape(B, C, Hp, patch_size, Wp, patch_size)
        .transpose(0, 2, 4, 1, 3, 5)
        .reshape(B, Hp * Wp, -1)
    )
    w_ref = conv_weight.reshape(d_model, -1).T
    y_bf16_ref = jnp.dot(
        patches_ref.astype(jnp.bfloat16),
        w_ref.astype(jnp.bfloat16),
        preferred_element_type=jnp.float32,
    ).astype(x.dtype)
    y_f32_ref = patches_ref @ w_ref

    assert y.shape == (B, Hp * Wp, d_model)
    assert y.dtype == x.dtype
    assert jnp.allclose(y, y_bf16_ref, atol=1e-3, rtol=1e-3)
    assert jnp.allclose(y, y_f32_ref, atol=5e-2, rtol=5e-2)

    print("KERNEL_OK")
</pallas_src>

<mosaic_0001>
module attributes {stable_mosaic.version = 11 : i64} {
  func.func @_patch_embed_kernel(%arg0: i32, %arg1: memref<16x48xbf16, #tpu.memory_space<vmem>>, %arg2: memref<48x32xbf16, #tpu.memory_space<vmem>>, %arg3: memref<16x32xf32, #tpu.memory_space<vmem>>) attributes {dimension_semantics = [#tpu.dimension_semantics<parallel>], iteration_bounds = array<i64: 2>, scalar_prefetch = 0 : i64, scratch_operands = 0 : i64, tpu.core_type = #tpu.core_type<tc>, window_params = [{transform_indices = @transform_0, window_bounds = array<i64: 16, 48>}, {pipeline_mode = #tpu.pipeline_mode<synchronous>, transform_indices = @transform_1, window_bounds = array<i64: 48, 32>}, {transform_indices = @transform_2, window_bounds = array<i64: 16, 32>}]} {
    %c0 = arith.constant 0 : index
    %c0_0 = arith.constant 0 : index
    %0 = vector.load %arg1[%c0, %c0_0] : memref<16x48xbf16, #tpu.memory_space<vmem>>, vector<16x48xbf16>
    %c0_1 = arith.constant 0 : index
    %c0_2 = arith.constant 0 : index
    %1 = vector.load %arg2[%c0_1, %c0_2] : memref<48x32xbf16, #tpu.memory_space<vmem>>, vector<48x32xbf16>
    %cst = arith.constant dense<0.000000e+00> : vector<16x32xf32>
    %2 = tpu.matmul %0, %1, %cst {dimension_numbers = #tpu.dot_dimension_numbers<[1], [0], [0], [1], [0, 0, 1, 1], [], []>} : vector<16x48xbf16>, vector<48x32xbf16>, vector<16x32xf32> -> vector<16x32xf32>
    %c0_3 = arith.constant 0 : index
    %c0_4 = arith.constant 0 : index
    %3 = vector.load %arg3[%c0_3, %c0_4] : memref<16x32xf32, #tpu.memory_space<vmem>>, vector<16x32xf32>
    tpu.vector_store %arg3[%c0_3, %c0_4], %2 {strides = array<i32>} : memref<16x32xf32, #tpu.memory_space<vmem>>, vector<16x32xf32>,
    return
  }
  func.func @transform_0(%arg0: i32) -> (i32, i32) {
    %c0_i32 = arith.constant 0 : i32
    %c0_i32_0 = arith.constant 0 : i32
    return %arg0, %c0_i32 : i32, i32
  }
  func.func @transform_1(%arg0: i32) -> (i32, i32) {
    %c0_i32 = arith.constant 0 : i32
    %c0_i32_0 = arith.constant 0 : i32
    %c0_i32_1 = arith.constant 0 : i32
    return %c0_i32, %c0_i32_0 : i32, i32
  }
  func.func @transform_2(%arg0: i32) -> (i32, i32) {
    %c0_i32 = arith.constant 0 : i32
    %c0_i32_0 = arith.constant 0 : i32
    return %arg0, %c0_i32 : i32, i32
  }
}

</mosaic_0001>

<llo_original>
// kernel: patch_embedding_forward.1
$region0: #{patch_embedding_forward.1}
  #allocation0 [shape = 'u32[]', space=smem, size = 0x4, offset = 0x4, fixed_abs, tag = 'smem constant byte address 0x4 - core index']
  #allocation1 [shape = 'u32[144,128]{1,0:T(1,128)}', space=vmem, size = 0x12000, scoped, tag = 'internal scratch']
  %s0 = inlined_call_operand.vmem [shape: bf16[32,48], index: 0, kind: input, shape index: {}]
  %s1 = inlined_call_operand.vmem [shape: bf16[48,32], index: 1, kind: input, shape index: {}]
  %s2 = inlined_call_operand.hbm [shape: f32[32,32], index: 2, kind: output, shape index: {}]
  %s3 = sld [smem:[#allocation0]]
  $region41: #{patch_embedding_forward.1} parent=0
    _
  %s5 = ssub.s32 1, %s3
  %s6 = scalar_select 0, %s5, %s3
  $region1: #{patch_embedding_forward.1} parent=0
    #allocation2 [shape = 'u8[16384]{0}', space=vmem, size = 0x4000, scoped, tag = 'output window, operand 0']
    #allocation3 [shape = 's32[2]{0}', space=sflag, size = 0x8, scoped, tag = 'scoped memory for patch_embedding_forward.1']
    %7 = vsyncpa [#allocation3], 0
    %s8 = scalar_lea.sflag [#allocation3], 1
    %9 = vsyncpa %s8, 0
    loop: start=0, step=1, limit=4
    $region2: #{patch_embedding_forward.1} parent=1 // loop_pre_header
      _
    $region3: #{patch_embedding_forward.1} parent=1 // loop_header
      %s11 = sphi 0, %s15
      %p12 = scmp.ge.s32.totalorder %s11, 4
      %s21 = sphi 0, %s23
      %s24 = sphi 0, %s21
      %s25 = sphi 0, %s24
      %s41 = sphi 0, %s25
      %s45 = sphi 0, %s45
      %s47 = sphi 0, %s45
      %s48 = sphi 0, %s47
      %s62 = sphi 0, %s48
      %s68 = sphi 0, %s70
      %s71 = sphi 0, %s68
      %s72 = sphi 0, %s71
      %s88 = sphi 0, %s72
    $region4: #{patch_embedding_forward.1} parent=1 // loop_header_branch
      %14 = sbr.rel (%p12) target = $region8
    $region5: #{patch_embedding_forward.1} parent=1 // loop_body
      %s16 = ssub.s32 %s11, 1
      %s17 = ssub.s32 %s11, 2
      %s18 = sadd.s32 %s11, 1
      %s19 = ssub.s32 %s11, %s18
      %p20 = scmp.eq.s32.totalorder %s19, 0
      %s22 = sadd.s32 %s21, 1
      %s23 = scalar_select %p20, %s21, %s22
      %p26 = pneg %p20
      %p27 = scmp.eq.s32.totalorder %s11, 1
      %p28 = por %p26, %p27
      %p29 = scmp.ne.s32.totalorder %s21, %s24
      %p30 = scmp.eq.s32.totalorder %s11, 0
      %p31 = por %p29, %p30
      %p32 = scmp.ne.s32.totalorder %s21, %s24
      %p33 = scmp.eq.s32.totalorder %s16, 1
      %p34 = por %p32, %p33
      %p35 = scmp.ne.s32.totalorder %s24, %s25
      %p36 = scmp.eq.s32.totalorder %s16, 0
      %p37 = por %p35, %p36
      %p38 = scmp.ne.s32.totalorder %s24, %s25
      %p39 = scmp.eq.s32.totalorder %s17, 1
      %p40 = por %p38, %p39
      %p42 = scmp.ne.s32.totalorder %s25, %s41
      %p43 = scmp.eq.s32.totalorder %s17, 0
      %p44 = por %p42, %p43
      %s46 = sadd.s32 %s45, 1
      %p49 = scmp.eq.s32.totalorder %s11, 1
      %p50 = scmp.ne.s32.totalorder %s45, %s47
      %p51 = scmp.eq.s32.totalorder %s11, 0
      %p52 = por %p50, %p51
      %p53 = scmp.ne.s32.totalorder %s45, %s47
      %p54 = scmp.eq.s32.totalorder %s16, 1
      %p55 = por %p53, %p54
      %p56 = scmp.ne.s32.totalorder %s47, %s48
      %p57 = scmp.eq.s32.totalorder %s16, 0
      %p58 = por %p56, %p57
      %p59 = scmp.ne.s32.totalorder %s47, %s48
      %p60 = scmp.eq.s32.totalorder %s17, 1
      %p61 = por %p59, %p60
      %p63 = scmp.ne.s32.totalorder %s48, %s62
      %p64 = scmp.eq.s32.totalorder %s17, 0
      %p65 = por %p63, %p64
      %s66 = ssub.s32 %s11, %s18
      %p67 = scmp.eq.s32.totalorder %s66, 0
      %s69 = sadd.s32 %s68, 1
      %s70 = scalar_select %p67, %s68, %s69
      %p73 = pneg %p67
      %p74 = scmp.eq.s32.totalorder %s11, 1
      %p75 = por %p73, %p74
      %p76 = scmp.ne.s32.totalorder %s68, %s71
      %p77 = scmp.eq.s32.totalorder %s11, 0
      %p78 = por %p76, %p77
      %p79 = scmp.ne.s32.totalorder %s68, %s71
      %p80 = scmp.eq.s32.totalorder %s16, 1
      %p81 = por %p79, %p80
      %p82 = scmp.ne.s32.totalorder %s71, %s72
      %p83 = scmp.eq.s32.totalorder %s16, 0
      %p84 = por %p82, %p83
      %p85 = scmp.ne.s32.totalorder %s71, %s72
      %p86 = scmp.eq.s32.totalorder %s17, 1
      %p87 = por %p85, %p86
      %p89 = scmp.ne.s32.totalorder %s72, %s88
      %p90 = scmp.eq.s32.totalorder %s17, 0
      %p91 = por %p89, %p90
      %p92 = scmp.le.s32.totalorder 1, %s11
      %p93 = scmp.lt.s32.totalorder %s11, 3
      %p94 = pnand %p92, %p93
      %p95 = pneg %p94
      // Predicated region
      $region9: #{patch_embedding_forward.1} parent=5 // pred_check
        _
      $region10: #{patch_embedding_forward.1} parent=5 // pred_check_branch
        %97 = sbr.rel (%p94) target = $region12
      $region11: #{patch_embedding_forward.1} parent=5 // pred_region
        %s98 = ssub.s32 %s11, 1
        // Predicated region
        $region13: #{patch_embedding_forward.1} parent=11 // pred_check
          %p99 = pneg %p58
        $region14: #{patch_embedding_forward.1} parent=11 // pred_check_branch
          %101 = sbr.rel (%p99) target = $region16
        $region15: #{patch_embedding_forward.1} parent=11 // pred_region
          _
        $region16: #{patch_embedding_forward.1} parent=11 // pred_fallthru
          _
      $region12: #{patch_embedding_forward.1} parent=5 // pred_fallthru
        _
      %p102 = scmp.lt.s32.totalorder %s11, 2
      // Predicated region
      $region17: #{patch_embedding_forward.1} parent=5 // pred_check
        %p103 = pneg %p102
      $region18: #{patch_embedding_forward.1} parent=5 // pred_check_branch
        %105 = sbr.rel (%p103) target = $region20
      $region19: #{patch_embedding_forward.1} parent=5 // pred_region
        // Predicated region
        $region21: #{patch_embedding_forward.1} parent=19 // pred_check
          %p106 = pneg %p31
        $region22: #{patch_embedding_forward.1} parent=19 // pred_check_branch
          %108 = sbr.rel (%p106) target = $region24
        $region23: #{patch_embedding_forward.1} parent=19 // pred_region
          %s109 = smul.u32 2, %s11
          %p110 = scmp.lt.s32.totalorder %s109, 3
          %s111 = scalar_select %p110, %s109, 3
          %s112 = smul.addr %s111, 4
          %s113 = scalar_lea.vmem %s0, %s112
          %s114 = smul.u32 2, %s11
        $region24: #{patch_embedding_forward.1} parent=19 // pred_fallthru
          _
      $region20: #{patch_embedding_forward.1} parent=5 // pred_fallthru
        _
      %p115 = scmp.le.s32.totalorder 1, %s11
      %p116 = scmp.lt.s32.totalorder %s11, 3
      %p117 = pnand %p115, %p116
      %p118 = pneg %p117
      // Predicated region
      $region25: #{patch_embedding_forward.1} parent=5 // pred_check
        _
      $region26: #{patch_embedding_forward.1} parent=5 // pred_check_branch
        %120 = sbr.rel (%p117) target = $region28
      $region27: #{patch_embedding_forward.1} parent=5 // pred_region
        %s121 = ssub.s32 %s11, 1
        %s122 = smul.u32 2, %s16
        %p123 = scmp.lt.s32.totalorder %s122, 3
        %s124 = scalar_select %p123, %s122, 3
        %s125 = smul.addr %s124, 4
        %s126 = scalar_lea.vmem %s0, %s125
        %p127 = pneg %p37
        %p128 = pneg %p34
        %p129 = pneg %p58
        %p130 = pneg %p55
        %p131 = pneg %p84
        %p132 = pneg %p81
        %s133 = sand.u32 %s71, 1
        %s134 = scalar_lea.sflag [#allocation3], %s133
        %s135 = sand.u32 %s71, 1
        %s136 = smul.addr %s135, 16
        %s137 = scalar_lea.vmem [#allocation2], %s136
        %s138 = smul.u32 2, %s16
        %p139 = scmp.lt.s32.totalorder %s138, 3
        %s140 = scalar_select %p139, %s138, 3
        %s141 = smul.addr %s140, 4
        %s142 = scalar_lea.vmem %s0, %s141
        %s143 = smul.u32 2, %s16
        %s144 = smul.u32 2, %s16
        %v146 = vld [vmem:[%s142] sm:$0xf]
        %v147 = vld [vmem:[%s142 + $0x4] sm:$0xf]
        %v148 = vld [vmem:[%s1] sm:$0xf]
        %v149 = vld [vmem:[%s1 + $0x4] sm:$0xf]
        %v150 = vld [vmem:[%s1 + $0x8] sm:$0xf]
        %v151 = vld [vmem:[%s1 + $0xc] sm:$0xf]
        %v152 = vld [vmem:[%s1 + $0x10] sm:$0xf]
        %v153 = vld [vmem:[%s1 + $0x14] sm:$0xf]
        %v156 = vunpack.c.l.b16 %v146
        %v157 = vunpack.c.l.b16 %v147
        %v158 = vpack.c.b16 %v157, %v156
        %v165 = vunpack.c.l.b16 %v148
        %v166 = vunpack.c.l.b16 %v149
        %v167 = vunpack.c.l.b16 %v150
        %v168 = vunpack.c.l.b16 %v151
        %v169 = vunpack.c.l.b16 %v152
        %v170 = vunpack.c.l.b16 %v153
        %v171 = vpack.c.b16 %v166, %v165
        %v172 = vpack.c.b16 %v168, %v167
        %v173 = vpack.c.b16 %v170, %v169
        %vm177 = vcmask 392192
        %v179 = vsel %vm177, %v158, 0
        %181 = vmatprep.subr.bf16.mxu0 0
        %182 = vmatpush1.bf16.msra.mxu0 0
        %183 = vmatprep.subr.bf16.mxu0 0
        %184 = vmatpush1.bf16.msra.mxu0 0
        %185 = vmatprep.subr.bf16.mxu0 0
        %186 = vmatpush1.bf16.msra.mxu0 0
        %187 = vmatprep.subr.bf16.mxu0 0
        %188 = vmatpush1.bf16.msra.mxu0 0
        %189 = vmatprep.subr.bf16.mxu0 0
        %190 = vmatpush1.bf16.msra.mxu0 0
        %191 = vmatprep.subr.bf16.mxu0 0
        %192 = vmatpush1.bf16.msra.mxu0 %v173
        %193 = vmatprep.subr.bf16.mxu0 0
        %194 = vmatpush1.bf16.msra.mxu0 %v172
        %195 = vmatprep.subr.bf16.mxu0 0
        %196 = vmatpush1.bf16.msra.mxu0 %v171
        %197 = vmatprep.subr.bf16.mxu0 0
        %198 = vmatpush2.bf16.msra.mxu0 0
        %199 = vmatprep.subr.bf16.mxu0 0
        %200 = vmatpush2.bf16.msra.mxu0 0
        %201 = vmatprep.subr.bf16.mxu0 0
        %202 = vmatpush2.bf16.msra.mxu0 0
        %203 = vmatprep.subr.bf16.mxu0 0
        %204 = vmatpush2.bf16.msra.mxu0 0
        %205 = vmatprep.subr.bf16.mxu0 0
        %206 = vmatpush2.bf16.msra.mxu0 0
        %207 = vmatprep.subr.bf16.mxu0 0
        %208 = vmatpush2.bf16.msra.mxu0 0
        %209 = vmatprep.subr.bf16.mxu0 0
        %210 = vmatpush2.bf16.msra.mxu0 0
        %211 = vmatprep.subr.bf16.mxu0 0
        %212 = vmatpush2.bf16.msra.mxu0 0
        %213 = vmatprep.mubr.bf16.mxu0 0
        %214 = vmatmul.mubr.bf16.gmra.mxu0 %v179
        %v215 = vpop.f32.mrf.mxu0
        %v216 = vadd.f32 0.0, %v215
        %v217 = vpop.f32.mrf.mxu0
        %v218 = vpop.f32.mrf.mxu0
        %v219 = vadd.f32 0.0, %v218
        %v220 = vpop.f32.mrf.mxu0
        %221 = vdwg.mxu0
        %vm222 = vcmask 261120
        %223 = vst.msk [vmem:[%s137] sm:$0xff] %vm222, %v216
        %224 = vst.msk [vmem:[%s137 + $0x8] sm:$0xff] %vm222, %v219
        %s225 = sand.u32 %s71, 1
        %s226 = scalar_lea.sflag [#allocation3], %s225
        %s227 = sand.u32 %s71, 1
        %s228 = smul.addr %s227, 16
        %s229 = scalar_lea.vmem [#allocation2], %s228
        // Predicated region
        $region29: #{patch_embedding_forward.1} parent=27 // pred_check
          %p230 = pneg %p81
        $region30: #{patch_embedding_forward.1} parent=27 // pred_check_branch
          %232 = sbr.rel (%p230) target = $region32
        $region31: #{patch_embedding_forward.1} parent=27 // pred_region
          %s233 = smul.u32 2, %s16
          %s235 = ssub.s32 256, 256
          %236 = vsyncadd %s226, %s235
          %s237 = smul.addr %s233, 128
          %s238 = scalar_lea.hbm %s2, %s237
          %s239 = sshll.u32 %s229, 4
          %s240 = int_to_ptr.vmem [resolvable:$true] %s239
          %245 = dma.vmem_to_hbm [thread:$0]  %s240, 256, %s238, %s226, 128, 128, 8
        $region32: #{patch_embedding_forward.1} parent=27 // pred_fallthru
          _
      $region28: #{patch_embedding_forward.1} parent=5 // pred_fallthru
        _
      %p246 = scmp.le.s32.totalorder 2, %s11
      // Predicated region
      $region33: #{patch_embedding_forward.1} parent=5 // pred_check
        %p247 = pneg %p246
      $region34: #{patch_embedding_forward.1} parent=5 // pred_check_branch
        %249 = sbr.rel (%p247) target = $region36
      $region35: #{patch_embedding_forward.1} parent=5 // pred_region
        %s250 = ssub.s32 %s11, 2
        // Predicated region
        $region37: #{patch_embedding_forward.1} parent=35 // pred_check
          %p251 = pneg %p87
        $region38: #{patch_embedding_forward.1} parent=35 // pred_check_branch
          %253 = sbr.rel (%p251) target = $region40
        $region39: #{patch_embedding_forward.1} parent=35 // pred_region
          %s254 = sand.u32 %s72, 1
          %s255 = scalar_lea.sflag [#allocation3], %s254
          %s256 = sand.u32 %s72, 1
          %s257 = smul.addr %s256, 16
          %s258 = scalar_lea.vmem [#allocation2], %s257
          %259 = dma.done %s255, 256
        $region40: #{patch_embedding_forward.1} parent=35 // pred_fallthru
          _
      $region36: #{patch_embedding_forward.1} parent=5 // pred_fallthru
        _
    $region6: #{patch_embedding_forward.1} parent=1 // loop_footer
      %s15 = sadd.s32 1, %s11
    $region7: #{patch_embedding_forward.1} parent=1 // loop_footer_branch
      %10 = sbr.rel target = $region3
    $region8: #{patch_embedding_forward.1} parent=1 // loop_exit
      _
    %260 = vsyncpa [#allocation3], 1
    %s261 = scalar_lea.sflag [#allocation3], 1
    %262 = vsyncpa %s261, 1

</llo_original>
